<compile_context>
chip_gen: v7x
topology: tpu7x:2x2x1
jax: 0.10.0
libtpu: 0.0.40
codegen_flags: <defaults>
</compile_context>

<pallas_src>
import functools

import jax
import jax.numpy as jnp
from jax import lax
from jax.experimental import pallas as pl
from jax.experimental.pallas import tpu as pltpu


def _round_up(x, m):
    return (x + m - 1) // m * m


def _pick_vmem_limit():
    """Per-generation scoped VMEM limit with ~25% headroom (<=100 MiB)."""
    try:
        cap = pltpu.get_tpu_info().vmem_capacity_bytes
    except Exception:
        cap = 64 * 1024 * 1024
    return int(min(cap * 3 // 4, 100 * 1024 * 1024))


def _pick_q_tile(n):
    if n <= 256:
        return n
    for cand in (256, 128):
        if n % cand == 0:
            return cand
    # TODO(synk): pad/mask N for ragged sequence lengths instead of falling back
    # to a full-sequence query tile.
    return n


def _mhsa_kernel(x_ref, wq_ref, wkv_ref, wo_ref, bo_ref, o_ref, kv_ref, ctx_ref,
                 *, heads, dim_head, tq):
    """One (batch, q-tile) grid step.

    x_ref:   (N, Dp)    full sequence for this batch element (bf16, resident)
    wq_ref:  (Dp, HD)   scale-folded Q projection
    wkv_ref: (Dp, 2*HD) K/V projection, per-head interleaved columns
    wo_ref:  (HD, Dp)   output projection
    bo_ref:  (1, Dp)    output bias (f32)
    o_ref:   (TQ, Dp)   output tile
    kv_ref:  (N, 2*HD)  bf16 scratch holding K/V for the whole sequence
    ctx_ref: (TQ, HD)   bf16 scratch holding concatenated head outputs
    """
    qi = pl.program_id(1)

    # K/V projection for the full sequence, computed once per batch element and
    # reused across all query tiles (qi resets to 0 whenever b advances).
    @pl.when(qi == 0)
    def _():
        kv = jnp.dot(x_ref[...], wkv_ref[...], preferred_element_type=jnp.float32)
        kv_ref[...] = kv.astype(kv_ref.dtype)

    # Q projection only for this query tile (scale already folded into Wq).
    row0 = pl.multiple_of(qi * tq, tq)
    x_q = x_ref[pl.ds(row0, tq), :]                               # (TQ, Dp) bf16
    q = jnp.dot(x_q, wq_ref[...], preferred_element_type=jnp.float32)
    q = q.astype(x_q.dtype)                                       # (TQ, HD) bf16

    two_dh = 2 * dim_head
    for h in range(heads):                                        # static, traced loop
        base = h * two_dh
        k_h = kv_ref[:, base:base + dim_head]                     # (N, Dh)
        v_h = kv_ref[:, base + dim_head:base + two_dh]            # (N, Dh)
        q_h = q[:, h * dim_head:(h + 1) * dim_head]               # (TQ, Dh)

        # q @ k^T without an explicit transpose (contract last dims).
        dots = lax.dot_general(
            q_h, k_h,
            dimension_numbers=(((1,), (1,)), ((), ())),
            preferred_element_type=jnp.float32)                   # (TQ, N) f32

        # Softmax stats in f32; normalization deferred past the p@v matmul.
        m = jnp.max(dots, axis=-1, keepdims=True)
        p = jnp.exp(dots - m)
        s = jnp.sum(p, axis=-1, keepdims=True)                    # (TQ, 1)

        ov = jnp.dot(p.astype(v_h.dtype), v_h,
                     preferred_element_type=jnp.float32)          # (TQ, Dh)
        ctx_ref[:, h * dim_head:(h + 1) * dim_head] = (
            ov * pl.reciprocal(s, approx=True)).astype(ctx_ref.dtype)

    # Single wide output projection + bias (f32 accumulate, lane-dense store).
    out = jnp.dot(ctx_ref[...], wo_ref[...], preferred_element_type=jnp.float32)
    out = out + bo_ref[...].astype(jnp.float32)
    o_ref[...] = out.astype(o_ref.dtype)


def prepare_mhsa_params(w_qkv, w_out, b_out, *, heads, dim_head, scale,
                        compute_dtype=jnp.bfloat16):
    """One-time parameter preprocessing (hoisted out of the per-call path).

    w_qkv: (3*H*Dh, D) = to_qkv.weight;  w_out: (D, H*Dh) = to_out[0].weight;
    b_out: (D,) = to_out[0].bias.
    """
    inner = heads * dim_head
    dim = w_qkv.shape[1]
    d_pad = _round_up(dim, 128)

    # x @ W layouts; fold 1/sqrt(Dh) into Wq (exact in f32, then cast).
    wq = jnp.transpose(w_qkv[:inner, :]) * jnp.asarray(scale, w_qkv.dtype)   # (D, HD)
    wk = jnp.transpose(w_qkv[inner:2 * inner, :])                            # (D, HD)
    wv = jnp.transpose(w_qkv[2 * inner:, :])                                 # (D, HD)

    # Interleave K/V columns per head: [k_h0 | v_h0 | k_h1 | v_h1 | ...].
    wk_r = wk.reshape(dim, heads, dim_head)
    wv_r = wv.reshape(dim, heads, dim_head)
    wkv = jnp.stack([wk_r, wv_r], axis=2).reshape(dim, 2 * inner)            # (D, 2*HD)

    wo = jnp.transpose(w_out)                                                # (HD, D)
    bo = b_out.reshape(1, dim).astype(jnp.float32)

    # Pad D to a multiple of 128 with zeros (exact: padded rows/cols contribute 0).
    if d_pad != dim:
        pad = d_pad - dim
        wq = jnp.pad(wq, ((0, pad), (0, 0)))
        wkv = jnp.pad(wkv, ((0, pad), (0, 0)))
        wo = jnp.pad(wo, ((0, 0), (0, pad)))
        bo = jnp.pad(bo, ((0, 0), (0, pad)))

    return {
        "wq": wq.astype(compute_dtype),
        "wkv": wkv.astype(compute_dtype),
        "wo": wo.astype(compute_dtype),
        "bo": bo,                               # kept f32; added in f32 in-kernel
        "dim": dim,
        "d_pad": d_pad,
    }


def mhsa_forward(x, params, *, heads, dim_head, compute_dtype=jnp.bfloat16):
    """x: (B, N, D) -> (B, N, D); same semantics as the PyTorch module forward."""
    B, N, D = x.shape
    HD = heads * dim_head
    d_pad = params["d_pad"]
    out_dtype = x.dtype

    xc = x.astype(compute_dtype)
    if d_pad != D:
        xc = jnp.pad(xc, ((0, 0), (0, 0), (0, d_pad - D)))

    tq = _pick_q_tile(N)
    nq = N // tq

    kernel = functools.partial(_mhsa_kernel, heads=heads, dim_head=dim_head, tq=tq)

    # TODO(synk): on v7x consider pipeline_mode=pl.Buffered(1) for the
    # constant-index weight specs to halve their VMEM footprint.
    out = pl.pallas_call(
        kernel,
        out_shape=jax.ShapeDtypeStruct((B, N, d_pad), out_dtype),
        grid_spec=pltpu.PrefetchScalarGridSpec(
            num_scalar_prefetch=0,
            grid=(B, nq),
            in_specs=[
                # Full sequence per batch element; block index is constant in qi,
                # so it stays VMEM-resident across query tiles (no re-DMA).
                pl.BlockSpec((pl.Squeezed(), N, d_pad), lambda b, q: (b, 0, 0)),
                pl.BlockSpec((d_pad, HD), lambda b, q: (0, 0)),        # Wq
                pl.BlockSpec((d_pad, 2 * HD), lambda b, q: (0, 0)),    # Wkv
                pl.BlockSpec((HD, d_pad), lambda b, q: (0, 0)),        # Wo
                pl.BlockSpec((1, d_pad), lambda b, q: (0, 0)),         # bias
            ],
            out_specs=pl.BlockSpec((pl.Squeezed(), tq, d_pad), lambda b, q: (b, q, 0)),
            scratch_shapes=[
                pltpu.VMEM((N, 2 * HD), compute_dtype),   # K/V for the whole sequence
                pltpu.VMEM((tq, HD), compute_dtype),      # concatenated head outputs
            ],
        ),
        compiler_params=pltpu.CompilerParams(
            # qi must stay "arbitrary": the K/V scratch is filled at qi==0 and
            # reused by later tiles of the same batch element.
            dimension_semantics=("parallel", "arbitrary"),
            vmem_limit_bytes=_pick_vmem_limit(),
        ),
    )(xc, params["wq"], params["wkv"], params["wo"], params["bo"])

    return out[..., :D] if d_pad != D else out


def multi_head_self_attention(x, w_qkv, w_out, b_out, *, heads, dim_head, scale):
    """Convenience wrapper: one-shot prep + forward."""
    params = prepare_mhsa_params(w_qkv, w_out, b_out, heads=heads,
                                 dim_head=dim_head, scale=scale)
    return mhsa_forward(x, params, heads=heads, dim_head=dim_head)


def reference_mhsa(x, w_qkv, w_out, b_out, heads, dim_head, scale):
    """Plain-JAX f32 reference mirroring the PyTorch forward (incl. to_out bias)."""
    B, N, D = x.shape
    inner = heads * dim_head
    qkv = x @ w_qkv.T                                       # (B, N, 3*inner)
    q, k, v = jnp.split(qkv, 3, axis=-1)

    def split_heads(t):
        return t.reshape(B, N, heads, dim_head).transpose(0, 2, 1, 3)

    q, k, v = map(split_heads, (q, k, v))
    dots = jnp.einsum("bhid,bhjd->bhij", q, k) * scale
    attn = jax.nn.softmax(dots, axis=-1)
    out = jnp.einsum("bhij,bhjd->bhid", attn, v)
    out = out.transpose(0, 2, 1, 3).reshape(B, N, inner)
    return out @ w_out.T + b_out


if __name__ == "__main__":
    # Small shapes consistent with the module.
    B, N = 2, 8
    dim, heads, dim_head = 32, 4, 16
    inner = heads * dim_head
    scale = dim_head ** (-0.5)

    key = jax.random.PRNGKey(0)
    kx, kqkv, ko, kb = jax.random.split(key, 4)

    x = jax.random.normal(kx, (B, N, dim), dtype=jnp.float32)

    # Deterministic synthetic parameters (shapes match the nn.Linear weights).
    w_qkv = jax.random.normal(kqkv, (3 * inner, dim), dtype=jnp.float32) * 0.05  # to_qkv.weight
    w_out = jax.random.normal(ko, (dim, inner), dtype=jnp.float32) * 0.05        # to_out[0].weight
    b_out = jax.random.normal(kb, (dim,), dtype=jnp.float32) * 0.05              # to_out[0].bias

    # One-time param prep (transpose / scale-fold / interleave / pad / bf16 cast),
    # then the forward call.
    params = prepare_mhsa_params(w_qkv, w_out, b_out, heads=heads,
                                 dim_head=dim_head, scale=scale)
    out = mhsa_forward(x, params, heads=heads, dim_head=dim_head)
    out = jax.block_until_ready(out)

    ref = reference_mhsa(x, w_qkv, w_out, b_out, heads, dim_head, scale)
    assert out.shape == (B, N, dim)
    # Tolerance reflects bf16 MXU operands (f32 accumulation) and the EUP
    # approximate reciprocal used for the deferred softmax normalization.
    assert jnp.allclose(out, ref, atol=1e-2, rtol=1e-2), "mismatch vs reference"

    print("KERNEL_OK")
</pallas_src>

<mosaic_0001>
module attributes {stable_mosaic.version = 11 : i64} {
  func.func @_mhsa_kernel(%arg0: i32, %arg1: i32, %arg2: memref<1x8x128xbf16, #tpu.memory_space<vmem>>, %arg3: memref<128x64xbf16, #tpu.memory_space<vmem>>, %arg4: memref<128x128xbf16, #tpu.memory_space<vmem>>, %arg5: memref<64x128xbf16, #tpu.memory_space<vmem>>, %arg6: memref<1x128xf32, #tpu.memory_space<vmem>>, %arg7: memref<1x8x128xf32, #tpu.memory_space<vmem>>, %arg8: memref<8x128xbf16, #tpu.memory_space<vmem>>, %arg9: memref<8x64xbf16, #tpu.memory_space<vmem>>) attributes {dimension_semantics = [#tpu.dimension_semantics<parallel>, #tpu.dimension_semantics<arbitrary>], iteration_bounds = array<i64: 2, 1>, scalar_prefetch = 0 : i64, scratch_operands = 2 : i64, tpu.core_type = #tpu.core_type<tc>, window_params = [{transform_indices = @transform_0, window_bounds = array<i64: 1, 8, 128>}, {pipeline_mode = #tpu.pipeline_mode<synchronous>, transform_indices = @transform_1, window_bounds = array<i64: 128, 64>}, {pipeline_mode = #tpu.pipeline_mode<synchronous>, transform_indices = @transform_2, window_bounds = array<i64: 128, 128>}, {pipeline_mode = #tpu.pipeline_mode<synchronous>, transform_indices = @transform_3, window_bounds = array<i64: 64, 128>}, {pipeline_mode = #tpu.pipeline_mode<synchronous>, transform_indices = @transform_4, window_bounds = array<i64: 1, 128>}, {transform_indices = @transform_5, window_bounds = array<i64: 1, 8, 128>}]} {
    %c0_i32 = arith.constant 0 : i32
    %0 = arith.cmpi eq, %arg1, %c0_i32 : i32
    %1 = arith.extui %0 : i1 to i32
    %c0_i32_0 = arith.constant 0 : i32
    %2 = arith.cmpi ne, %1, %c0_i32_0 : i32
    scf.if %2 {
      %c0_47 = arith.constant 0 : index
      %c0_48 = arith.constant 0 : index
      %c0_49 = arith.constant 0 : index
      %92 = vector.load %arg2[%c0_47, %c0_48, %c0_49] : memref<1x8x128xbf16, #tpu.memory_space<vmem>>, vector<1x8x128xbf16>
      %93 = vector.shape_cast %92 : vector<1x8x128xbf16> to vector<8x128xbf16>
      %c0_50 = arith.constant 0 : index
      %c0_51 = arith.constant 0 : index
      %94 = vector.load %arg4[%c0_50, %c0_51] : memref<128x128xbf16, #tpu.memory_space<vmem>>, vector<128x128xbf16>
      %cst_52 = arith.constant dense<0.000000e+00> : vector<8x128xf32>
      %95 = tpu.matmul %93, %94, %cst_52 {dimension_numbers = #tpu.dot_dimension_numbers<[1], [0], [0], [1], [0, 0, 1, 1], [], []>} : vector<8x128xbf16>, vector<128x128xbf16>, vector<8x128xf32> -> vector<8x128xf32>
      %96 = arith.truncf %95 : vector<8x128xf32> to vector<8x128xbf16>
      %c0_53 = arith.constant 0 : index
      %c0_54 = arith.constant 0 : index
      %97 = vector.load %arg8[%c0_53, %c0_54] : memref<8x128xbf16, #tpu.memory_space<vmem>>, vector<8x128xbf16>
      tpu.vector_store %arg8[%c0_53, %c0_54], %96 {strides = array<i32>} : memref<8x128xbf16, #tpu.memory_space<vmem>>, vector<8x128xbf16>,
    } else {
    }
    %c8_i32 = arith.constant 8 : i32
    %3 = arith.muli %arg1, %c8_i32 : i32
    %4 = tpu.assume_multiple %3, 8 : i32
    %c0 = arith.constant 0 : index
    %5 = arith.index_cast %4 : i32 to index
    %c0_1 = arith.constant 0 : index
    %6 = vector.load %arg2[%c0, %5, %c0_1] : memref<1x8x128xbf16, #tpu.memory_space<vmem>>, vector<1x8x128xbf16>
    %7 = vector.shape_cast %6 : vector<1x8x128xbf16> to vector<8x128xbf16>
    %c0_2 = arith.constant 0 : index
    %c0_3 = arith.constant 0 : index
    %8 = vector.load %arg3[%c0_2, %c0_3] : memref<128x64xbf16, #tpu.memory_space<vmem>>, vector<128x64xbf16>
    %cst = arith.constant dense<0.000000e+00> : vector<8x64xf32>
    %9 = tpu.matmul %7, %8, %cst {dimension_numbers = #tpu.dot_dimension_numbers<[1], [0], [0], [1], [0, 0, 1, 1], [], []>} : vector<8x128xbf16>, vector<128x64xbf16>, vector<8x64xf32> -> vector<8x64xf32>
    %10 = arith.truncf %9 : vector<8x64xf32> to vector<8x64xbf16>
    %c0_4 = arith.constant 0 : index
    %c0_5 = arith.constant 0 : index
    %11 = vector.load %arg8[%c0_4, %c0_5] : memref<8x128xbf16, #tpu.memory_space<vmem>>, vector<8x16xbf16>
    %c0_6 = arith.constant 0 : index
    %c16 = arith.constant 16 : index
    %12 = vector.load %arg8[%c0_6, %c16] : memref<8x128xbf16, #tpu.memory_space<vmem>>, vector<8x16xbf16>
    %13 = vector.extract_strided_slice %10 {offsets = [0, 0], sizes = [8, 16], strides = [1, 1]} : vector<8x64xbf16> to vector<8x16xbf16>
    %cst_7 = arith.constant dense<0.000000e+00> : vector<8x8xf32>
    %14 = tpu.matmul %13, %11, %cst_7 {dimension_numbers = #tpu.dot_dimension_numbers<[1], [1], [0], [0], [0, 0, 1, 0], [], []>} : vector<8x16xbf16>, vector<8x16xbf16>, vector<8x8xf32> -> vector<8x8xf32>
    %cst_8 = arith.constant dense<0xFF800000> : vector<8xf32>
    %15 = vector.multi_reduction <maximumf>, %14, %cst_8 [1] : vector<8x8xf32> to vector<8xf32>
    %16 = vector.shape_cast %15 : vector<8xf32> to vector<8x1xf32>
    %17 = vector.broadcast %16 : vector<8x1xf32> to vector<8x8xf32>
    %18 = arith.subf %14, %17 : vector<8x8xf32>
    %19 = math.exp %18 : vector<8x8xf32>
    %cst_9 = arith.constant dense<0.000000e+00> : vector<8xf32>
    %20 = vector.multi_reduction <add>, %19, %cst_9 [1] : vector<8x8xf32> to vector<8xf32>
    %21 = vector.shape_cast %20 : vector<8xf32> to vector<8x1xf32>
    %22 = arith.truncf %19 : vector<8x8xf32> to vector<8x8xbf16>
    %cst_10 = arith.constant dense<0.000000e+00> : vector<8x16xf32>
    %23 = tpu.matmul %22, %12, %cst_10 {dimension_numbers = #tpu.dot_dimension_numbers<[1], [0], [0], [1], [0, 0, 1, 1], [], []>} : vector<8x8xbf16>, vector<8x16xbf16>, vector<8x16xf32> -> vector<8x16xf32>
    %24 = tpu.reciprocal %21 {approx = true} : vector<8x1xf32> -> vector<8x1xf32>
    %25 = vector.broadcast %24 : vector<8x1xf32> to vector<8x16xf32>
    %26 = arith.mulf %23, %25 : vector<8x16xf32>
    %27 = arith.truncf %26 : vector<8x16xf32> to vector<8x16xbf16>
    %c0_11 = arith.constant 0 : index
    %c0_12 = arith.constant 0 : index
    %28 = vector.load %arg9[%c0_11, %c0_12] : memref<8x64xbf16, #tpu.memory_space<vmem>>, vector<8x16xbf16>
    tpu.vector_store %arg9[%c0_11, %c0_12], %27 {strides = array<i32>} : memref<8x64xbf16, #tpu.memory_space<vmem>>, vector<8x16xbf16>,
    %c0_13 = arith.constant 0 : index
    %c32 = arith.constant 32 : index
    %29 = vector.load %arg8[%c0_13, %c32] : memref<8x128xbf16, #tpu.memory_space<vmem>>, vector<8x16xbf16>
    %c0_14 = arith.constant 0 : index
    %c48 = arith.constant 48 : index
    %30 = vector.load %arg8[%c0_14, %c48] : memref<8x128xbf16, #tpu.memory_space<vmem>>, vector<8x16xbf16>
    %31 = vector.extract_strided_slice %10 {offsets = [0, 16], sizes = [8, 16], strides = [1, 1]} : vector<8x64xbf16> to vector<8x16xbf16>
    %cst_15 = arith.constant dense<0.000000e+00> : vector<8x8xf32>
    %32 = tpu.matmul %31, %29, %cst_15 {dimension_numbers = #tpu.dot_dimension_numbers<[1], [1], [0], [0], [0, 0, 1, 0], [], []>} : vector<8x16xbf16>, vector<8x16xbf16>, vector<8x8xf32> -> vector<8x8xf32>
    %cst_16 = arith.constant dense<0xFF800000> : vector<8xf32>
    %33 = vector.multi_reduction <maximumf>, %32, %cst_16 [1] : vector<8x8xf32> to vector<8xf32>
    %34 = vector.shape_cast %33 : vector<8xf32> to vector<8x1xf32>
    %35 = vector.broadcast %34 : vector<8x1xf32> to vector<8x8xf32>
    %36 = arith.subf %32, %35 : vector<8x8xf32>
    %37 = math.exp %36 : vector<8x8xf32>
    %cst_17 = arith.constant dense<0.000000e+00> : vector<8xf32>
    %38 = vector.multi_reduction <add>, %37, %cst_17 [1] : vector<8x8xf32> to vector<8xf32>
    %39 = vector.shape_cast %38 : vector<8xf32> to vector<8x1xf32>
    %40 = arith.truncf %37 : vector<8x8xf32> to vector<8x8xbf16>
    %cst_18 = arith.constant dense<0.000000e+00> : vector<8x16xf32>
    %41 = tpu.matmul %40, %30, %cst_18 {dimension_numbers = #tpu.dot_dimension_numbers<[1], [0], [0], [1], [0, 0, 1, 1], [], []>} : vector<8x8xbf16>, vector<8x16xbf16>, vector<8x16xf32> -> vector<8x16xf32>
    %42 = tpu.reciprocal %39 {approx = true} : vector<8x1xf32> -> vector<8x1xf32>
    %43 = vector.broadcast %42 : vector<8x1xf32> to vector<8x16xf32>
    %44 = arith.mulf %41, %43 : vector<8x16xf32>
    %45 = arith.truncf %44 : vector<8x16xf32> to vector<8x16xbf16>
    %c0_19 = arith.constant 0 : index
    %c16_20 = arith.constant 16 : index
    %46 = vector.load %arg9[%c0_19, %c16_20] : memref<8x64xbf16, #tpu.memory_space<vmem>>, vector<8x16xbf16>
    tpu.vector_store %arg9[%c0_19, %c16_20], %45 {strides = array<i32>} : memref<8x64xbf16, #tpu.memory_space<vmem>>, vector<8x16xbf16>,
    %c0_21 = arith.constant 0 : index
    %c64 = arith.constant 64 : index
    %47 = vector.load %arg8[%c0_21, %c64] : memref<8x128xbf16, #tpu.memory_space<vmem>>, vector<8x16xbf16>
    %c0_22 = arith.constant 0 : index
    %c80 = arith.constant 80 : index
    %48 = vector.load %arg8[%c0_22, %c80] : memref<8x128xbf16, #tpu.memory_space<vmem>>, vector<8x16xbf16>
    %49 = vector.extract_strided_slice %10 {offsets = [0, 32], sizes = [8, 16], strides = [1, 1]} : vector<8x64xbf16> to vector<8x16xbf16>
    %cst_23 = arith.constant dense<0.000000e+00> : vector<8x8xf32>
    %50 = tpu.matmul %49, %47, %cst_23 {dimension_numbers = #tpu.dot_dimension_numbers<[1], [1], [0], [0], [0, 0, 1, 0], [], []>} : vector<8x16xbf16>, vector<8x16xbf16>, vector<8x8xf32> -> vector<8x8xf32>
    %cst_24 = arith.constant dense<0xFF800000> : vector<8xf32>
    %51 = vector.multi_reduction <maximumf>, %50, %cst_24 [1] : vector<8x8xf32> to vector<8xf32>
    %52 = vector.shape_cast %51 : vector<8xf32> to vector<8x1xf32>
    %53 = vector.broadcast %52 : vector<8x1xf32> to vector<8x8xf32>
    %54 = arith.subf %50, %53 : vector<8x8xf32>
    %55 = math.exp %54 : vector<8x8xf32>
    %cst_25 = arith.constant dense<0.000000e+00> : vector<8xf32>
    %56 = vector.multi_reduction <add>, %55, %cst_25 [1] : vector<8x8xf32> to vector<8xf32>
    %57 = vector.shape_cast %56 : vector<8xf32> to vector<8x1xf32>
    %58 = arith.truncf %55 : vector<8x8xf32> to vector<8x8xbf16>
    %cst_26 = arith.constant dense<0.000000e+00> : vector<8x16xf32>
    %59 = tpu.matmul %58, %48, %cst_26 {dimension_numbers = #tpu.dot_dimension_numbers<[1], [0], [0], [1], [0, 0, 1, 1], [], []>} : vector<8x8xbf16>, vector<8x16xbf16>, vector<8x16xf32> -> vector<8x16xf32>
    %60 = tpu.reciprocal %57 {approx = true} : vector<8x1xf32> -> vector<8x1xf32>
    %61 = vector.broadcast %60 : vector<8x1xf32> to vector<8x16xf32>
    %62 = arith.mulf %59, %61 : vector<8x16xf32>
    %63 = arith.truncf %62 : vector<8x16xf32> to vector<8x16xbf16>
    %c0_27 = arith.constant 0 : index
    %c32_28 = arith.constant 32 : index
    %64 = vector.load %arg9[%c0_27, %c32_28] : memref<8x64xbf16, #tpu.memory_space<vmem>>, vector<8x16xbf16>
    tpu.vector_store %arg9[%c0_27, %c32_28], %63 {strides = array<i32>} : memref<8x64xbf16, #tpu.memory_space<vmem>>, vector<8x16xbf16>,
    %c0_29 = arith.constant 0 : index
    %c96 = arith.constant 96 : index
    %65 = vector.load %arg8[%c0_29, %c96] : memref<8x128xbf16, #tpu.memory_space<vmem>>, vector<8x16xbf16>
    %c0_30 = arith.constant 0 : index
    %c112 = arith.constant 112 : index
    %66 = vector.load %arg8[%c0_30, %c112] : memref<8x128xbf16, #tpu.memory_space<vmem>>, vector<8x16xbf16>
    %67 = vector.extract_strided_slice %10 {offsets = [0, 48], sizes = [8, 16], strides = [1, 1]} : vector<8x64xbf16> to vector<8x16xbf16>
    %cst_31 = arith.constant dense<0.000000e+00> : vector<8x8xf32>
    %68 = tpu.matmul %67, %65, %cst_31 {dimension_numbers = #tpu.dot_dimension_numbers<[1], [1], [0], [0], [0, 0, 1, 0], [], []>} : vector<8x16xbf16>, vector<8x16xbf16>, vector<8x8xf32> -> vector<8x8xf32>
    %cst_32 = arith.constant dense<0xFF800000> : vector<8xf32>
    %69 = vector.multi_reduction <maximumf>, %68, %cst_32 [1] : vector<8x8xf32> to vector<8xf32>
    %70 = vector.shape_cast %69 : vector<8xf32> to vector<8x1xf32>
    %71 = vector.broadcast %70 : vector<8x1xf32> to vector<8x8xf32>
    %72 = arith.subf %68, %71 : vector<8x8xf32>
    %73 = math.exp %72 : vector<8x8xf32>
    %cst_33 = arith.constant dense<0.000000e+00> : vector<8xf32>
    %74 = vector.multi_reduction <add>, %73, %cst_33 [1] : vector<8x8xf32> to vector<8xf32>
    %75 = vector.shape_cast %74 : vector<8xf32> to vector<8x1xf32>
    %76 = arith.truncf %73 : vector<8x8xf32> to vector<8x8xbf16>
    %cst_34 = arith.constant dense<0.000000e+00> : vector<8x16xf32>
    %77 = tpu.matmul %76, %66, %cst_34 {dimension_numbers = #tpu.dot_dimension_numbers<[1], [0], [0], [1], [0, 0, 1, 1], [], []>} : vector<8x8xbf16>, vector<8x16xbf16>, vector<8x16xf32> -> vector<8x16xf32>
    %78 = tpu.reciprocal %75 {approx = true} : vector<8x1xf32> -> vector<8x1xf32>
    %79 = vector.broadcast %78 : vector<8x1xf32> to vector<8x16xf32>
    %80 = arith.mulf %77, %79 : vector<8x16xf32>
    %81 = arith.truncf %80 : vector<8x16xf32> to vector<8x16xbf16>
    %c0_35 = arith.constant 0 : index
    %c48_36 = arith.constant 48 : index
    %82 = vector.load %arg9[%c0_35, %c48_36] : memref<8x64xbf16, #tpu.memory_space<vmem>>, vector<8x16xbf16>
    tpu.vector_store %arg9[%c0_35, %c48_36], %81 {strides = array<i32>} : memref<8x64xbf16, #tpu.memory_space<vmem>>, vector<8x16xbf16>,
    %c0_37 = arith.constant 0 : index
    %c0_38 = arith.constant 0 : index
    %83 = vector.load %arg9[%c0_37, %c0_38] : memref<8x64xbf16, #tpu.memory_space<vmem>>, vector<8x64xbf16>
    %c0_39 = arith.constant 0 : index
    %c0_40 = arith.constant 0 : index
    %84 = vector.load %arg5[%c0_39, %c0_40] : memref<64x128xbf16, #tpu.memory_space<vmem>>, vector<64x128xbf16>
    %cst_41 = arith.constant dense<0.000000e+00> : vector<8x128xf32>
    %85 = tpu.matmul %83, %84, %cst_41 {dimension_numbers = #tpu.dot_dimension_numbers<[1], [0], [0], [1], [0, 0, 1, 1], [], []>} : vector<8x64xbf16>, vector<64x128xbf16>, vector<8x128xf32> -> vector<8x128xf32>
    %c0_42 = arith.constant 0 : index
    %c0_43 = arith.constant 0 : index
    %86 = vector.load %arg6[%c0_42, %c0_43] : memref<1x128xf32, #tpu.memory_space<vmem>>, vector<1x128xf32>
    %87 = vector.broadcast %86 : vector<1x128xf32> to vector<8x128xf32>
    %88 = arith.addf %85, %87 : vector<8x128xf32>
    %c0_44 = arith.constant 0 : index
    %c0_45 = arith.constant 0 : index
    %c0_46 = arith.constant 0 : index
    %89 = vector.load %arg7[%c0_44, %c0_45, %c0_46] : memref<1x8x128xf32, #tpu.memory_space<vmem>>, vector<1x8x128xf32>
    %90 = vector.shape_cast %89 : vector<1x8x128xf32> to vector<8x128xf32>
    %91 = vector.shape_cast %88 : vector<8x128xf32> to vector<1x8x128xf32>
    tpu.vector_store %arg7[%c0_44, %c0_45, %c0_46], %91 {strides = array<i32>} : memref<1x8x128xf32, #tpu.memory_space<vmem>>, vector<1x8x128xf32>,
    return
  }
  func.func @transform_0(%arg0: i32, %arg1: i32) -> (i32, i32, i32) {
    %c0_i32 = arith.constant 0 : i32
    %c0_i32_0 = arith.constant 0 : i32
    %c0_i32_1 = arith.constant 0 : i32
    return %arg0, %c0_i32, %c0_i32_0 : i32, i32, i32
  }
  func.func @transform_1(%arg0: i32, %arg1: i32) -> (i32, i32) {
    %c0_i32 = arith.constant 0 : i32
    %c0_i32_0 = arith.constant 0 : i32
    %c0_i32_1 = arith.constant 0 : i32
    return %c0_i32, %c0_i32_0 : i32, i32
  }
  func.func @transform_2(%arg0: i32, %arg1: i32) -> (i32, i32) {
    %c0_i32 = arith.constant 0 : i32
    %c0_i32_0 = arith.constant 0 : i32
    %c0_i32_1 = arith.constant 0 : i32
    return %c0_i32, %c0_i32_0 : i32, i32
  }
  func.func @transform_3(%arg0: i32, %arg1: i32) -> (i32, i32) {
    %c0_i32 = arith.constant 0 : i32
    %c0_i32_0 = arith.constant 0 : i32
    %c0_i32_1 = arith.constant 0 : i32
    return %c0_i32, %c0_i32_0 : i32, i32
  }
  func.func @transform_4(%arg0: i32, %arg1: i32) -> (i32, i32) {
    %c0_i32 = arith.constant 0 : i32
    %c0_i32_0 = arith.constant 0 : i32
    %c0_i32_1 = arith.constant 0 : i32
    return %c0_i32, %c0_i32_0 : i32, i32
  }
  func.func @transform_5(%arg0: i32, %arg1: i32) -> (i32, i32, i32) {
    %c0_i32 = arith.constant 0 : i32
    %c0_i32_0 = arith.constant 0 : i32
    return %arg0, %arg1, %c0_i32 : i32, i32, i32
  }
}

</mosaic_0001>

<llo_original>
// kernel: tpu_custom_call.1
$region0: #{tpu_custom_call.1}
  #allocation0 [shape = 'u32[]', space=smem, size = 0x4, offset = 0x4, fixed_abs, tag = 'smem constant byte address 0x4 - core index']
  #allocation1 [shape = 'u32[144,128]{1,0:T(1,128)}', space=vmem, size = 0x12000, scoped, tag = 'internal scratch']
  #allocation2 [shape = 'bf16[8,128]{1,0:T(8,128)(2,1)}', space=vmem, size = 0x800, scoped, tag = 'scratch operand']
  #allocation3 [shape = 'bf16[8,64]{1,0:T(8,128)(2,1)}', space=vmem, size = 0x800, scoped, tag = 'scratch operand']
  %s0 = inlined_call_operand.hbm [shape: bf16[2,8,128], index: 0, kind: input, shape index: {}]
  %s1 = inlined_call_operand.vmem [shape: bf16[128,64], index: 1, kind: input, shape index: {}]
  %s2 = inlined_call_operand.vmem [shape: bf16[128,128], index: 2, kind: input, shape index: {}]
  %s3 = inlined_call_operand.vmem [shape: bf16[64,128], index: 3, kind: input, shape index: {}]
  %s4 = inlined_call_operand.vmem [shape: f32[1,128], index: 4, kind: input, shape index: {}]
  %s5 = inlined_call_operand.hbm [shape: f32[2,8,128], index: 5, kind: output, shape index: {}]
  %s6 = sld [smem:[#allocation0]]
  $region61: #{tpu_custom_call.1} parent=0
    _
  %s8 = ssub.s32 1, %s6
  %s9 = scalar_select 0, %s8, %s6
  $region1: #{tpu_custom_call.1} parent=0
    #allocation4 [shape = 'u8[4096]{0}', space=vmem, size = 0x1000, scoped, tag = 'input window, operand 0']
    #allocation5 [shape = 's32[2]{0}', space=sflag, size = 0x8, scoped, tag = 'scoped memory for tpu_custom_call.1']
    #allocation6 [shape = 's32[2]{0}', space=sflag, size = 0x8, scoped, tag = 'scoped memory for tpu_custom_call.1']
    #allocation7 [shape = 'u8[8192]{0}', space=vmem, size = 0x2000, scoped, tag = 'output window, operand 0']
    %10 = vsyncpa [#allocation5], 0
    %s11 = scalar_lea.sflag [#allocation5], 1
    %12 = vsyncpa %s11, 0
    %13 = vsyncpa [#allocation6], 0
    %s14 = scalar_lea.sflag [#allocation6], 1
    %15 = vsyncpa %s14, 0
    loop: start=0, step=1, limit=4
    $region2: #{tpu_custom_call.1} parent=1 // loop_pre_header
      _
    $region3: #{tpu_custom_call.1} parent=1 // loop_header
      %s17 = sphi 0, %s21
      %p18 = scmp.ge.s32.totalorder %s17, 4
      %s24 = sphi 0, %s36
      %s25 = sphi 0, %s32
      %s26 = sphi 0, %s24
      %s27 = sphi 0, %s25
      %s28 = sphi 0, %s26
      %s29 = sphi 0, %s27
      %s39 = sphi 0, %s41
      %s42 = sphi 0, %s39
      %s43 = sphi 0, %s42
      %s59 = sphi 0, %s43
      %s63 = sphi 0, %s63
      %s65 = sphi 0, %s63
      %s66 = sphi 0, %s65
      %s80 = sphi 0, %s66
      %s84 = sphi 0, %s84
      %s86 = sphi 0, %s84
      %s87 = sphi 0, %s86
      %s101 = sphi 0, %s87
      %s105 = sphi 0, %s105
      %s107 = sphi 0, %s105
      %s108 = sphi 0, %s107
      %s122 = sphi 0, %s108
      %s126 = sphi 0, %s126
      %s128 = sphi 0, %s126
      %s129 = sphi 0, %s128
      %s143 = sphi 0, %s129
      %s151 = sphi 0, %s153
      %s154 = sphi 0, %s151
      %s155 = sphi 0, %s154
      %s171 = sphi 0, %s155
    $region4: #{tpu_custom_call.1} parent=1 // loop_header_branch
      %20 = sbr.rel (%p18) target = $region8
    $region5: #{tpu_custom_call.1} parent=1 // loop_body
      %s22 = ssub.s32 %s17, 1
      %s23 = ssub.s32 %s17, 2
      %s30 = sadd.s32 1, %s25
      %p31 = scmp.ge.s32.totalorder %s30, 1
      %s32 = scalar_select %p31, 0, %s30
      %s33 = sadd.s32 1, %s24
      %s34 = scalar_select %p31, %s33, %s24
      %p35 = scmp.ge.s32.totalorder %s34, 2
      %s36 = scalar_select %p35, 0, %s34
      %s37 = ssub.s32 %s24, %s36
      %p38 = scmp.eq.s32.totalorder %s37, 0
      %s40 = sadd.s32 %s39, 1
      %s41 = scalar_select %p38, %s39, %s40
      %p44 = pneg %p38
      %p45 = scmp.eq.s32.totalorder %s17, 1
      %p46 = por %p44, %p45
      %p47 = scmp.ne.s32.totalorder %s39, %s42
      %p48 = scmp.eq.s32.totalorder %s17, 0
      %p49 = por %p47, %p48
      %p50 = scmp.ne.s32.totalorder %s39, %s42
      %p51 = scmp.eq.s32.totalorder %s22, 1
      %p52 = por %p50, %p51
      %p53 = scmp.ne.s32.totalorder %s42, %s43
      %p54 = scmp.eq.s32.totalorder %s22, 0
      %p55 = por %p53, %p54
      %p56 = scmp.ne.s32.totalorder %s42, %s43
      %p57 = scmp.eq.s32.totalorder %s23, 1
      %p58 = por %p56, %p57
      %p60 = scmp.ne.s32.totalorder %s43, %s59
      %p61 = scmp.eq.s32.totalorder %s23, 0
      %p62 = por %p60, %p61
      %s64 = sadd.s32 %s63, 1
      %p67 = scmp.eq.s32.totalorder %s17, 1
      %p68 = scmp.ne.s32.totalorder %s63, %s65
      %p69 = scmp.eq.s32.totalorder %s17, 0
      %p70 = por %p68, %p69
      %p71 = scmp.ne.s32.totalorder %s63, %s65
      %p72 = scmp.eq.s32.totalorder %s22, 1
      %p73 = por %p71, %p72
      %p74 = scmp.ne.s32.totalorder %s65, %s66
      %p75 = scmp.eq.s32.totalorder %s22, 0
      %p76 = por %p74, %p75
      %p77 = scmp.ne.s32.totalorder %s65, %s66
      %p78 = scmp.eq.s32.totalorder %s23, 1
      %p79 = por %p77, %p78
      %p81 = scmp.ne.s32.totalorder %s66, %s80
      %p82 = scmp.eq.s32.totalorder %s23, 0
      %p83 = por %p81, %p82
      %s85 = sadd.s32 %s84, 1
      %p88 = scmp.eq.s32.totalorder %s17, 1
      %p89 = scmp.ne.s32.totalorder %s84, %s86
      %p90 = scmp.eq.s32.totalorder %s17, 0
      %p91 = por %p89, %p90
      %p92 = scmp.ne.s32.totalorder %s84, %s86
      %p93 = scmp.eq.s32.totalorder %s22, 1
      %p94 = por %p92, %p93
      %p95 = scmp.ne.s32.totalorder %s86, %s87
      %p96 = scmp.eq.s32.totalorder %s22, 0
      %p97 = por %p95, %p96
      %p98 = scmp.ne.s32.totalorder %s86, %s87
      %p99 = scmp.eq.s32.totalorder %s23, 1
      %p100 = por %p98, %p99
      %p102 = scmp.ne.s32.totalorder %s87, %s101
      %p103 = scmp.eq.s32.totalorder %s23, 0
      %p104 = por %p102, %p103
      %s106 = sadd.s32 %s105, 1
      %p109 = scmp.eq.s32.totalorder %s17, 1
      %p110 = scmp.ne.s32.totalorder %s105, %s107
      %p111 = scmp.eq.s32.totalorder %s17, 0
      %p112 = por %p110, %p111
      %p113 = scmp.ne.s32.totalorder %s105, %s107
      %p114 = scmp.eq.s32.totalorder %s22, 1
      %p115 = por %p113, %p114
      %p116 = scmp.ne.s32.totalorder %s107, %s108
      %p117 = scmp.eq.s32.totalorder %s22, 0
      %p118 = por %p116, %p117
      %p119 = scmp.ne.s32.totalorder %s107, %s108
      %p120 = scmp.eq.s32.totalorder %s23, 1
      %p121 = por %p119, %p120
      %p123 = scmp.ne.s32.totalorder %s108, %s122
      %p124 = scmp.eq.s32.totalorder %s23, 0
      %p125 = por %p123, %p124
      %s127 = sadd.s32 %s126, 1
      %p130 = scmp.eq.s32.totalorder %s17, 1
      %p131 = scmp.ne.s32.totalorder %s126, %s128
      %p132 = scmp.eq.s32.totalorder %s17, 0
      %p133 = por %p131, %p132
      %p134 = scmp.ne.s32.totalorder %s126, %s128
      %p135 = scmp.eq.s32.totalorder %s22, 1
      %p136 = por %p134, %p135
      %p137 = scmp.ne.s32.totalorder %s128, %s129
      %p138 = scmp.eq.s32.totalorder %s22, 0
      %p139 = por %p137, %p138
      %p140 = scmp.ne.s32.totalorder %s128, %s129
      %p141 = scmp.eq.s32.totalorder %s23, 1
      %p142 = por %p140, %p141
      %p144 = scmp.ne.s32.totalorder %s129, %s143
      %p145 = scmp.eq.s32.totalorder %s23, 0
      %p146 = por %p144, %p145
      %s147 = ssub.s32 %s24, %s36
      %s148 = ssub.s32 %s25, %s32
      %s149 = sor.u32 %s147, %s148
      %p150 = scmp.eq.s32.totalorder %s149, 0
      %s152 = sadd.s32 %s151, 1
      %s153 = scalar_select %p150, %s151, %s152
      %p156 = pneg %p150
      %p157 = scmp.eq.s32.totalorder %s17, 1
      %p158 = por %p156, %p157
      %p159 = scmp.ne.s32.totalorder %s151, %s154
      %p160 = scmp.eq.s32.totalorder %s17, 0
      %p161 = por %p159, %p160
      %p162 = scmp.ne.s32.totalorder %s151, %s154
      %p163 = scmp.eq.s32.totalorder %s22, 1
      %p164 = por %p162, %p163
      %p165 = scmp.ne.s32.totalorder %s154, %s155
      %p166 = scmp.eq.s32.totalorder %s22, 0
      %p167 = por %p165, %p166
      %p168 = scmp.ne.s32.totalorder %s154, %s155
      %p169 = scmp.eq.s32.totalorder %s23, 1
      %p170 = por %p168, %p169
      %p172 = scmp.ne.s32.totalorder %s155, %s171
      %p173 = scmp.eq.s32.totalorder %s23, 0
      %p174 = por %p172, %p173
      %p175 = scmp.le.s32.totalorder 1, %s17
      %p176 = scmp.lt.s32.totalorder %s17, 3
      %p177 = pnand %p175, %p176
      %p178 = pneg %p177
      // Predicated region
      $region9: #{tpu_custom_call.1} parent=5 // pred_check
        _
      $region10: #{tpu_custom_call.1} parent=5 // pred_check_branch
        %180 = sbr.rel (%p177) target = $region12
      $region11: #{tpu_custom_call.1} parent=5 // pred_region
        %s181 = ssub.s32 %s17, 1
        // Predicated region
        $region13: #{tpu_custom_call.1} parent=11 // pred_check
          %p182 = pneg %p76
        $region14: #{tpu_custom_call.1} parent=11 // pred_check_branch
          %184 = sbr.rel (%p182) target = $region16
        $region15: #{tpu_custom_call.1} parent=11 // pred_region
          _
        $region16: #{tpu_custom_call.1} parent=11 // pred_fallthru
          _
        // Predicated region
        $region17: #{tpu_custom_call.1} parent=11 // pred_check
          %p185 = pneg %p97
        $region18: #{tpu_custom_call.1} parent=11 // pred_check_branch
          %187 = sbr.rel (%p185) target = $region20
        $region19: #{tpu_custom_call.1} parent=11 // pred_region
          _
        $region20: #{tpu_custom_call.1} parent=11 // pred_fallthru
          _
        // Predicated region
        $region21: #{tpu_custom_call.1} parent=11 // pred_check
          %p188 = pneg %p118
        $region22: #{tpu_custom_call.1} parent=11 // pred_check_branch
          %190 = sbr.rel (%p188) target = $region24
        $region23: #{tpu_custom_call.1} parent=11 // pred_region
          _
        $region24: #{tpu_custom_call.1} parent=11 // pred_fallthru
          _
        // Predicated region
        $region25: #{tpu_custom_call.1} parent=11 // pred_check
          %p191 = pneg %p139
        $region26: #{tpu_custom_call.1} parent=11 // pred_check_branch
          %193 = sbr.rel (%p191) target = $region28
        $region27: #{tpu_custom_call.1} parent=11 // pred_region
          _
        $region28: #{tpu_custom_call.1} parent=11 // pred_fallthru
          _
      $region12: #{tpu_custom_call.1} parent=5 // pred_fallthru
        _
      %p194 = scmp.lt.s32.totalorder %s17, 2
      // Predicated region
      $region29: #{tpu_custom_call.1} parent=5 // pred_check
        %p195 = pneg %p194
      $region30: #{tpu_custom_call.1} parent=5 // pred_check_branch
        %197 = sbr.rel (%p195) target = $region32
      $region31: #{tpu_custom_call.1} parent=5 // pred_region
        // Predicated region
        $region33: #{tpu_custom_call.1} parent=31 // pred_check
          %p198 = pneg %p49
        $region34: #{tpu_custom_call.1} parent=31 // pred_check_branch
          %200 = sbr.rel (%p198) target = $region36
        $region35: #{tpu_custom_call.1} parent=31 // pred_region
          %s201 = sand.u32 %s39, 1
          %s202 = scalar_lea.sflag [#allocation5], %s201
          %s203 = sand.u32 %s39, 1
          %s204 = smul.addr %s203, 4
          %s205 = scalar_lea.vmem [#allocation4], %s204
          %s207 = ssub.s32 64, 64
          %208 = vsyncadd %s202, %s207
          %s209 = smul.addr %s24, 64
          %s210 = scalar_lea.hbm %s0, %s209
          %s212 = sshll.u32 %s205, 4
          %s213 = int_to_ptr.vmem [resolvable:$true] %s212
          %215 = dma.hbm_to_vmem [thread:$0]  %s210, 64, %s213, %s202
        $region36: #{tpu_custom_call.1} parent=31 // pred_fallthru
          _
      $region32: #{tpu_custom_call.1} parent=5 // pred_fallthru
        _
      %p216 = scmp.le.s32.totalorder 1, %s17
      %p217 = scmp.lt.s32.totalorder %s17, 3
      %p218 = pnand %p216, %p217
      %p219 = pneg %p218
      // Predicated region
      $region37: #{tpu_custom_call.1} parent=5 // pred_check
        _
      $region38: #{tpu_custom_call.1} parent=5 // pred_check_branch
        %221 = sbr.rel (%p218) target = $region40
      $region39: #{tpu_custom_call.1} parent=5 // pred_region
        %s222 = ssub.s32 %s17, 1
        %s223 = sand.u32 %s42, 1
        %s224 = scalar_lea.sflag [#allocation5], %s223
        %s225 = sand.u32 %s42, 1
        %s226 = smul.addr %s225, 4
        %s227 = scalar_lea.vmem [#allocation4], %s226
        // Predicated region
        $region41: #{tpu_custom_call.1} parent=39 // pred_check
          %p228 = pneg %p55
        $region42: #{tpu_custom_call.1} parent=39 // pred_check_branch
          %230 = sbr.rel (%p228) target = $region44
        $region43: #{tpu_custom_call.1} parent=39 // pred_region
          %231 = dma.done %s224, 64
        $region44: #{tpu_custom_call.1} parent=39 // pred_fallthru
          _
        %s232 = sand.u32 %s42, 1
        %s233 = scalar_lea.sflag [#allocation5], %s232
        %s234 = sand.u32 %s42, 1
        %s235 = smul.addr %s234, 4
        %s236 = scalar_lea.vmem [#allocation4], %s235
        %p237 = pneg %p55
        %p238 = pneg %p52
        %p239 = pneg %p76
        %p240 = pneg %p73
        %p241 = pneg %p97
        %p242 = pneg %p94
        %p243 = pneg %p118
        %p244 = pneg %p115
        %p245 = pneg %p139
        %p246 = pneg %p136
        %p247 = pneg %p167
        %p248 = pneg %p164
        %s249 = sand.u32 %s154, 1
        %s250 = scalar_lea.sflag [#allocation6], %s249
        %s251 = sand.u32 %s154, 1
        %s252 = smul.addr %s251, 8
        %s253 = scalar_lea.vmem [#allocation7], %s252
        %p255 = scmp.eq.s32.totalorder %s27, 0
        // Predicated region
        $region45: #{tpu_custom_call.1} parent=39 // pred_check
          %p256 = pneg %p255
        $region46: #{tpu_custom_call.1} parent=39 // pred_check_branch
          %258 = sbr.rel (%p256) target = $region48
        $region47: #{tpu_custom_call.1} parent=39 // pred_region
          %v259 = vld [vmem:[%s227] sm:$0xf]
          %v260 = vld [vmem:[%s2] sm:$0xf]
          %v261 = vld [vmem:[%s2 + $0x4] sm:$0xf]
          %v262 = vld [vmem:[%s2 + $0x8] sm:$0xf]
          %v263 = vld [vmem:[%s2 + $0xc] sm:$0xf]
          %v264 = vld [vmem:[%s2 + $0x10] sm:$0xf]
          %v265 = vld [vmem:[%s2 + $0x14] sm:$0xf]
          %v266 = vld [vmem:[%s2 + $0x18] sm:$0xf]
          %v267 = vld [vmem:[%s2 + $0x1c] sm:$0xf]
          %v268 = vld [vmem:[%s2 + $0x20] sm:$0xf]
          %v269 = vld [vmem:[%s2 + $0x24] sm:$0xf]
          %v270 = vld [vmem:[%s2 + $0x28] sm:$0xf]
          %v271 = vld [vmem:[%s2 + $0x2c] sm:$0xf]
          %v272 = vld [vmem:[%s2 + $0x30] sm:$0xf]
          %v273 = vld [vmem:[%s2 + $0x34] sm:$0xf]
          %v274 = vld [vmem:[%s2 + $0x38] sm:$0xf]
          %v275 = vld [vmem:[%s2 + $0x3c] sm:$0xf]
          %v292 = vunpack.c.l.b16 %v260
          %v293 = vunpack.c.l.b16 %v261
          %v294 = vunpack.c.l.b16 %v262
          %v295 = vunpack.c.l.b16 %v263
          %v296 = vunpack.c.l.b16 %v264
          %v297 = vunpack.c.l.b16 %v265
          %v298 = vunpack.c.l.b16 %v266
          %v299 = vunpack.c.l.b16 %v267
          %v300 = vunpack.c.l.b16 %v268
          %v301 = vunpack.c.l.b16 %v269
          %v302 = vunpack.c.l.b16 %v270
          %v303 = vunpack.c.l.b16 %v271
          %v304 = vunpack.c.l.b16 %v272
          %v305 = vunpack.c.l.b16 %v273
          %v306 = vunpack.c.l.b16 %v274
          %v307 = vunpack.c.l.b16 %v275
          %v308 = vpack.c.b16 %v293, %v292
          %v309 = vpack.c.b16 %v295, %v294
          %v310 = vpack.c.b16 %v297, %v296
          %v311 = vpack.c.b16 %v299, %v298
          %v312 = vpack.c.b16 %v301, %v300
          %v313 = vpack.c.b16 %v303, %v302
          %v314 = vpack.c.b16 %v305, %v304
          %v315 = vpack.c.b16 %v307, %v306
          %324 = vmatprep.subr.bf16.mxu0 0
          %325 = vmatpush1.bf16.msra.mxu0 %v308
          %326 = vmatprep.subr.bf16.mxu0 0
          %327 = vmatpush1.bf16.msra.mxu0 %v309
          %328 = vmatprep.subr.bf16.mxu0 0
          %329 = vmatpush1.bf16.msra.mxu0 %v310
          %330 = vmatprep.subr.bf16.mxu0 0
          %331 = vmatpush1.bf16.msra.mxu0 %v311
          %332 = vmatprep.subr.bf16.mxu0 0
          %333 = vmatpush1.bf16.msra.mxu0 %v312
          %334 = vmatprep.subr.bf16.mxu0 0
          %335 = vmatpush1.bf16.msra.mxu0 %v313
          %336 = vmatprep.subr.bf16.mxu0 0
          %337 = vmatpush1.bf16.msra.mxu0 %v314
          %338 = vmatprep.subr.bf16.mxu0 0
          %339 = vmatpush1.bf16.msra.mxu0 %v315
          %340 = vmatprep.subr.bf16.mxu0 0
          %341 = vmatpush1.bf16.msra.mxu0 0
          %342 = vmatprep.subr.bf16.mxu0 0
          %343 = vmatpush1.bf16.msra.mxu0 0
          %344 = vmatprep.subr.bf16.mxu0 0
          %345 = vmatpush1.bf16.msra.mxu0 0
          %346 = vmatprep.subr.bf16.mxu0 0
          %347 = vmatpush1.bf16.msra.mxu0 0
          %348 = vmatprep.subr.bf16.mxu0 0
          %349 = vmatpush1.bf16.msra.mxu0 0
          %350 = vmatprep.subr.bf16.mxu0 0
          %351 = vmatpush1.bf16.msra.mxu0 0
          %352 = vmatprep.subr.bf16.mxu0 0
          %353 = vmatpush1.bf16.msra.mxu0 0
          %354 = vmatprep.subr.bf16.mxu0 0
          %355 = vmatpush1.bf16.msra.mxu0 0
          %356 = vmatprep.mubr.bf16.mxu0 0
          %357 = vmatmul.mubr.bf16.gmra.mrb[0].mxu0 %v259
          %v358 = vpop.f32.mrb[0].mxu0
          %v359 = vadd.f32 0.0, %v358
          %v360 = vpop.f32.mrb[0].mxu0
          %v361 = vpop.f32.mrb[0].mxu0
          %v362 = vpop.f32.mrb[0].mxu0
          %363 = vdwg.mxu0
          %v364 = vpack.c.bf16 %v359, %v359
          %365 = vst [vmem:[#allocation2] sm:$0xf] %v364
        $region48: #{tpu_custom_call.1} parent=39 // pred_fallthru
          _
        %s366 = smul.u32 %s27, 8
        %s367 = sshra.s32 %s366, 3
        %s368 = sand.u32 %s366, 7
        %s369 = smul.addr %s367, 4
        %s370 = scalar_lea.vmem %s227, %s369 [#allocation4]
        %v371 = vld [vmem:[%s370] sm:$0xf]
        %v372 = vld [vmem:[%s1] sm:$0xf]
        %v373 = vld [vmem:[%s1 + $0x4] sm:$0xf]
        %v374 = vld [vmem:[%s1 + $0x8] sm:$0xf]
        %v375 = vld [vmem:[%s1 + $0xc] sm:$0xf]
        %v376 = vld [vmem:[%s1 + $0x10] sm:$0xf]
        %v377 = vld [vmem:[%s1 + $0x14] sm:$0xf]
        %v378 = vld [vmem:[%s1 + $0x18] sm:$0xf]
        %v379 = vld [vmem:[%s1 + $0x1c] sm:$0xf]
        %v380 = vld [vmem:[%s1 + $0x20] sm:$0xf]
        %v381 = vld [vmem:[%s1 + $0x24] sm:$0xf]
        %v382 = vld [vmem:[%s1 + $0x28] sm:$0xf]
        %v383 = vld [vmem:[%s1 + $0x2c] sm:$0xf]
        %v384 = vld [vmem:[%s1 + $0x30] sm:$0xf]
        %v385 = vld [vmem:[%s1 + $0x34] sm:$0xf]
        %v386 = vld [vmem:[%s1 + $0x38] sm:$0xf]
        %v387 = vld [vmem:[%s1 + $0x3c] sm:$0xf]
        %v404 = vunpack.c.l.b16 %v372
        %v405 = vunpack.c.l.b16 %v373
        %v406 = vunpack.c.l.b16 %v374
        %v407 = vunpack.c.l.b16 %v375
        %v408 = vunpack.c.l.b16 %v376
        %v409 = vunpack.c.l.b16 %v377
        %v410 = vunpack.c.l.b16 %v378
        %v411 = vunpack.c.l.b16 %v379
        %v412 = vunpack.c.l.b16 %v380
        %v413 = vunpack.c.l.b16 %v381
        %v414 = vunpack.c.l.b16 %v382
        %v415 = vunpack.c.l.b16 %v383
        %v416 = vunpack.c.l.b16 %v384
        %v417 = vunpack.c.l.b16 %v385
        %v418 = vunpack.c.l.b16 %v386
        %v419 = vunpack.c.l.b16 %v387
        %v420 = vpack.c.b16 %v405, %v404
        %v421 = vpack.c.b16 %v407, %v406
        %v422 = vpack.c.b16 %v409, %v408
        %v423 = vpack.c.b16 %v411, %v410
        %v424 = vpack.c.b16 %v413, %v412
        %v425 = vpack.c.b16 %v415, %v414
        %v426 = vpack.c.b16 %v417, %v416
        %v427 = vpack.c.b16 %v419, %v418
        %436 = vmatprep.subr.bf16.mxu0 0
        %437 = vmatpush1.bf16.msra.mxu0 %v420
        %438 = vmatprep.subr.bf16.mxu0 0
        %439 = vmatpush1.bf16.msra.mxu0 %v421
        %440 = vmatprep.subr.bf16.mxu0 0
        %441 = vmatpush1.bf16.msra.mxu0 %v422
        %442 = vmatprep.subr.bf16.mxu0 0
        %443 = vmatpush1.bf16.msra.mxu0 %v423
        %444 = vmatprep.subr.bf16.mxu0 0
        %445 = vmatpush1.bf16.msra.mxu0 %v424
        %446 = vmatprep.subr.bf16.mxu0 0
        %447 = vmatpush1.bf16.msra.mxu0 %v425
        %448 = vmatprep.subr.bf16.mxu0 0
        %449 = vmatpush1.bf16.msra.mxu0 %v426
        %450 = vmatprep.subr.bf16.mxu0 0
        %451 = vmatpush1.bf16.msra.mxu0 %v427
        %452 = vmatprep.subr.bf16.mxu0 0
        %453 = vmatpush1.bf16.msra.mxu0 0
        %454 = vmatprep.subr.bf16.mxu0 0
        %455 = vmatpush1.bf16.msra.mxu0 0
        %456 = vmatprep.subr.bf16.mxu0 0
        %457 = vmatpush1.bf16.msra.mxu0 0
        %458 = vmatprep.subr.bf16.mxu0 0
        %459 = vmatpush1.bf16.msra.mxu0 0
        %460 = vmatprep.subr.bf16.mxu0 0
        %461 = vmatpush1.bf16.msra.mxu0 0
        %462 = vmatprep.subr.bf16.mxu0 0
        %463 = vmatpush1.bf16.msra.mxu0 0
        %464 = vmatprep.subr.bf16.mxu0 0
        %465 = vmatpush1.bf16.msra.mxu0 0
        %466 = vmatprep.subr.bf16.mxu0 0
        %467 = vmatpush1.bf16.msra.mxu0 0
        %468 = vmatprep.mubr.bf16.mxu0 0
        %469 = vmatmul.mubr.bf16.gmra.mrb[0].mxu0 %v371
        %v470 = vpop.f32.mrb[0].mxu0
        %v471 = vadd.f32 0.0, %v470
        %v472 = vpop.f32.mrb[0].mxu0
        %v473 = vpop.f32.mrb[0].mxu0
        %v474 = vpop.f32.mrb[0].mxu0
        %475 = vdwg.mxu0
        %v476 = vpack.c.bf16 %v471, %v471
        %v477 = vld [vmem:[#allocation2] sm:$0xf]
        %vm478 = vcmask 130048
        %v480 = vsel %vm478, %v476, 0
        %v483 = vsel %vm478, %v477, 0
        %485 = vmatprep.subr.bf16.mxu0 0
        %486 = vmatpush1.bf16.xpose.msra.mxu0 %v483
        %487 = vmatprep.subr.bf16.mxu0 0
        %488 = vmatpush1.bf16.xpose.msra.mxu0 0
        %489 = vmatprep.subr.bf16.mxu0 0
        %490 = vmatpush1.bf16.xpose.msra.mxu0 0
        %491 = vmatprep.subr.bf16.mxu0 0
        %492 = vmatpush1.bf16.xpose.msra.mxu0 0
        %493 = vmatprep.subr.bf16.mxu0 0
        %494 = vmatpush1.bf16.xpose.msra.mxu0 0
        %495 = vmatprep.subr.bf16.mxu0 0
        %496 = vmatpush1.bf16.xpose.msra.mxu0 0
        %497 = vmatprep.subr.bf16.mxu0 0
        %498 = vmatpush1.bf16.xpose.msra.mxu0 0
        %499 = vmatprep.subr.bf16.mxu0 0
        %500 = vmatpush1.bf16.xpose.msra.mxu0 0
        %501 = vmatprep.subr.bf16.mxu0 0
        %502 = vmatpush1.bf16.xpose.msra.mxu0 0
        %503 = vmatprep.subr.bf16.mxu0 0
        %504 = vmatpush1.bf16.xpose.msra.mxu0 0
        %505 = vmatprep.subr.bf16.mxu0 0
        %506 = vmatpush1.bf16.xpose.msra.mxu0 0
        %507 = vmatprep.subr.bf16.mxu0 0
        %508 = vmatpush1.bf16.xpose.msra.mxu0 0
        %509 = vmatprep.subr.bf16.mxu0 0
        %510 = vmatpush1.bf16.xpose.msra.mxu0 0
        %511 = vmatprep.subr.bf16.mxu0 0
        %512 = vmatpush1.bf16.xpose.msra.mxu0 0
        %513 = vmatprep.subr.bf16.mxu0 0
        %514 = vmatpush1.bf16.xpose.msra.mxu0 0
        %515 = vmatprep.subr.bf16.mxu0 0
        %516 = vmatpush1.bf16.xpose.msra.mxu0 0
        %517 = vmatprep.mubr.bf16.mxu0 0
        %518 = vmatmul.mubr.bf16.gmra.mrb[0].mxu0 %v480
        %v519 = vpop.f32.mrb[0].mxu0
        %v520 = vadd.f32 0.0, %v519
        %v521 = vpop.f32.mrb[0].mxu0
        %v522 = vpop.f32.mrb[0].mxu0
        %v523 = vpop.f32.mrb[0].mxu0
        %524 = vdwg.mxu0
        %vm525 = vcmask 64512
        %v526 = vsel %vm525, %v520, -inf
        %527 = vmax.xlane.f32.xlu0 %v526
        %v528 = vpop.xlane.xlu0 %527
        %v529 = vsub.f32 %v520, %v528
        %v530 = vmul.f32 %v529, 1.442695
        %v531 = vpow.pop %v530
        %v532 = vsel %vm525, %v531, 0.0
        %533 = vadd.xlane.f32.xlu0 %v532
        %v534 = vpop.xlane.xlu0 %533
        %v535 = vpack.c.bf16 %v531, %v531
        %v537 = vunpack.c.l.b16 %v477
        %v538 = vpack.c.b16 %v537, %v537
        %539 = vrot.lane.b32.xlu0 %v538, 112
        %v540 = vpop.permute.xlu0 %539
        %v542 = vsel %vm525, %v535, 0
        %vm544 = vcmask 1043456
        %v546 = vsel %vm544, %v540, 0
        %548 = vmatprep.subr.bf16.mxu0 0
        %549 = vmatpush1.bf16.msra.mxu0 %v546
        %550 = vmatprep.subr.bf16.mxu0 0
        %551 = vmatpush1.bf16.msra.mxu0 0
        %552 = vmatprep.subr.bf16.mxu0 0
        %553 = vmatpush1.bf16.msra.mxu0 0
        %554 = vmatprep.subr.bf16.mxu0 0
        %555 = vmatpush1.bf16.msra.mxu0 0
        %556 = vmatprep.subr.bf16.mxu0 0
        %557 = vmatpush1.bf16.msra.mxu0 0
        %558 = vmatprep.subr.bf16.mxu0 0
        %559 = vmatpush1.bf16.msra.mxu0 0
        %560 = vmatprep.subr.bf16.mxu0 0
        %561 = vmatpush1.bf16.msra.mxu0 0
        %562 = vmatprep.subr.bf16.mxu0 0
        %563 = vmatpush1.bf16.msra.mxu0 0
        %564 = vmatprep.subr.bf16.mxu0 0
        %565 = vmatpush1.bf16.msra.mxu0 0
        %566 = vmatprep.subr.bf16.mxu0 0
        %567 = vmatpush1.bf16.msra.mxu0 0
        %568 = vmatprep.subr.bf16.mxu0 0
        %569 = vmatpush1.bf16.msra.mxu0 0
        %570 = vmatprep.subr.bf16.mxu0 0
        %571 = vmatpush1.bf16.msra.mxu0 0
        %572 = vmatprep.subr.bf16.mxu0 0
        %573 = vmatpush1.bf16.msra.mxu0 0
        %574 = vmatprep.subr.bf16.mxu0 0
        %575 = vmatpush1.bf16.msra.mxu0 0
        %576 = vmatprep.subr.bf16.mxu0 0
        %577 = vmatpush1.bf16.msra.mxu0 0
        %578 = vmatprep.subr.bf16.mxu0 0
        %579 = vmatpush1.bf16.msra.mxu0 0
        %580 = vmatprep.mubr.bf16.mxu0 0
        %581 = vmatmul.mubr.bf16.gmra.mrb[0].mxu0 %v542
        %v582 = vpop.f32.mrb[0].mxu0
        %v583 = vadd.f32 0.0, %v582
        %v584 = vpop.f32.mrb[0].mxu0
        %v585 = vpop.f32.mrb[0].mxu0
        %v586 = vpop.f32.mrb[0].mxu0
        %587 = vdwg.mxu0
        %v588 = vrcp.pop %v534
        %v589 = vmul.f32 %v583, %v588
        %v590 = vpack.c.bf16 %v589, %v589
        %vm591 = vcmask 125952
        %592 = vst.msk [vmem:[#allocation3] sm:$0xf] %vm591, %v590
        %v593 = vld [vmem:[#allocation2] sm:$0xf]
        %595 = vrot.lane.b32.xlu0 %v476, 112
        %v596 = vpop.permute.xlu0 %595
        %v598 = vunpack.c.l.b16 %v593
        %v599 = vpack.c.b16 %v598, %v598
        %600 = vrot.lane.b32.xlu0 %v599, 96
        %v601 = vpop.permute.xlu0 %600
        %v603 = vsel %vm478, %v596, 0
        %v606 = vsel %vm478, %v601, 0
        %608 = vmatprep.subr.bf16.mxu0 0
        %609 = vmatpush1.bf16.xpose.msra.mxu0 %v606
        %610 = vmatprep.subr.bf16.mxu0 0
        %611 = vmatpush1.bf16.xpose.msra.mxu0 0
        %612 = vmatprep.subr.bf16.mxu0 0
        %613 = vmatpush1.bf16.xpose.msra.mxu0 0
        %614 = vmatprep.subr.bf16.mxu0 0
        %615 = vmatpush1.bf16.xpose.msra.mxu0 0
        %616 = vmatprep.subr.bf16.mxu0 0
        %617 = vmatpush1.bf16.xpose.msra.mxu0 0
        %618 = vmatprep.subr.bf16.mxu0 0
        %619 = vmatpush1.bf16.xpose.msra.mxu0 0
        %620 = vmatprep.subr.bf16.mxu0 0
        %621 = vmatpush1.bf16.xpose.msra.mxu0 0
        %622 = vmatprep.subr.bf16.mxu0 0
        %623 = vmatpush1.bf16.xpose.msra.mxu0 0
        %624 = vmatprep.subr.bf16.mxu0 0
        %625 = vmatpush1.bf16.xpose.msra.mxu0 0
        %626 = vmatprep.subr.bf16.mxu0 0
        %627 = vmatpush1.bf16.xpose.msra.mxu0 0
        %628 = vmatprep.subr.bf16.mxu0 0
        %629 = vmatpush1.bf16.xpose.msra.mxu0 0
        %630 = vmatprep.subr.bf16.mxu0 0
        %631 = vmatpush1.bf16.xpose.msra.mxu0 0
        %632 = vmatprep.subr.bf16.mxu0 0
        %633 = vmatpush1.bf16.xpose.msra.mxu0 0
        %634 = vmatprep.subr.bf16.mxu0 0
        %635 = vmatpush1.bf16.xpose.msra.mxu0 0
        %636 = vmatprep.subr.bf16.mxu0 0
        %637 = vmatpush1.bf16.xpose.msra.mxu0 0
        %638 = vmatprep.subr.bf16.mxu0 0
        %639 = vmatpush1.bf16.xpose.msra.mxu0 0
        %640 = vmatprep.mubr.bf16.mxu0 0
        %641 = vmatmul.mubr.bf16.gmra.mrb[0].mxu0 %v603
        %v642 = vpop.f32.mrb[0].mxu0
        %v643 = vadd.f32 0.0, %v642
        %v644 = vpop.f32.mrb[0].mxu0
        %v645 = vpop.f32.mrb[0].mxu0
        %v646 = vpop.f32.mrb[0].mxu0
        %647 = vdwg.mxu0
        %v648 = vsel %vm525, %v643, -inf
        %649 = vmax.xlane.f32.xlu0 %v648
        %v650 = vpop.xlane.xlu0 %649
        %v651 = vsub.f32 %v643, %v650
        %v652 = vmul.f32 %v651, 1.442695
        %v653 = vpow.pop %v652
        %v654 = vsel %vm525, %v653, 0.0
        %655 = vadd.xlane.f32.xlu0 %v654
        %v656 = vpop.xlane.xlu0 %655
        %v657 = vpack.c.bf16 %v653, %v653
        %658 = vrot.lane.b32.xlu0 %v599, 80
        %v659 = vpop.permute.xlu0 %658
        %v661 = vsel %vm525, %v657, 0
        %v664 = vsel %vm544, %v659, 0
        %666 = vmatprep.subr.bf16.mxu0 0
        %667 = vmatpush1.bf16.msra.mxu0 %v664
        %668 = vmatprep.subr.bf16.mxu0 0
        %669 = vmatpush1.bf16.msra.mxu0 0
        %670 = vmatprep.subr.bf16.mxu0 0
        %671 = vmatpush1.bf16.msra.mxu0 0
        %672 = vmatprep.subr.bf16.mxu0 0
        %673 = vmatpush1.bf16.msra.mxu0 0
        %674 = vmatprep.subr.bf16.mxu0 0
        %675 = vmatpush1.bf16.msra.mxu0 0
        %676 = vmatprep.subr.bf16.mxu0 0
        %677 = vmatpush1.bf16.msra.mxu0 0
        %678 = vmatprep.subr.bf16.mxu0 0
        %679 = vmatpush1.bf16.msra.mxu0 0
        %680 = vmatprep.subr.bf16.mxu0 0
        %681 = vmatpush1.bf16.msra.mxu0 0
        %682 = vmatprep.subr.bf16.mxu0 0
        %683 = vmatpush1.bf16.msra.mxu0 0
        %684 = vmatprep.subr.bf16.mxu0 0
        %685 = vmatpush1.bf16.msra.mxu0 0
        %686 = vmatprep.subr.bf16.mxu0 0
        %687 = vmatpush1.bf16.msra.mxu0 0
        %688 = vmatprep.subr.bf16.mxu0 0
        %689 = vmatpush1.bf16.msra.mxu0 0
        %690 = vmatprep.subr.bf16.mxu0 0
        %691 = vmatpush1.bf16.msra.mxu0 0
        %692 = vmatprep.subr.bf16.mxu0 0
        %693 = vmatpush1.bf16.msra.mxu0 0
        %694 = vmatprep.subr.bf16.mxu0 0
        %695 = vmatpush1.bf16.msra.mxu0 0
        %696 = vmatprep.subr.bf16.mxu0 0
        %697 = vmatpush1.bf16.msra.mxu0 0
        %698 = vmatprep.mubr.bf16.mxu0 0
        %699 = vmatmul.mubr.bf16.gmra.mrb[0].mxu0 %v661
        %v700 = vpop.f32.mrb[0].mxu0
        %v701 = vadd.f32 0.0, %v700
        %v702 = vpop.f32.mrb[0].mxu0
        %v703 = vpop.f32.mrb[0].mxu0
        %v704 = vpop.f32.mrb[0].mxu0
        %705 = vdwg.mxu0
        %v706 = vrcp.pop %v656
        %v707 = vmul.f32 %v701, %v706
        %v708 = vpack.c.bf16 %v707, %v707
        %v710 = vunpack.c.l.b16 %v708
        %v711 = vpack.c.b16 %v710, %v710
        %712 = vrot.lane.b32.xlu0 %v711, 16
        %v713 = vpop.permute.xlu0 %712
        %vm715 = vcmask 257152
        %716 = vst.msk [vmem:[#allocation3] sm:$0xf] %vm715, %v713
        %v717 = vld [vmem:[#allocation2] sm:$0xf]
        %718 = vrot.lane.b32.xlu0 %v476, 96
        %v719 = vpop.permute.xlu0 %718
        %v721 = vunpack.c.l.b16 %v717
        %v722 = vpack.c.b16 %v721, %v721
        %723 = vrot.lane.b32.xlu0 %v722, 64
        %v724 = vpop.permute.xlu0 %723
        %v726 = vsel %vm478, %v719, 0
        %v729 = vsel %vm478, %v724, 0
        %731 = vmatprep.subr.bf16.mxu0 0
        %732 = vmatpush1.bf16.xpose.msra.mxu0 %v729
        %733 = vmatprep.subr.bf16.mxu0 0
        %734 = vmatpush1.bf16.xpose.msra.mxu0 0
        %735 = vmatprep.subr.bf16.mxu0 0
        %736 = vmatpush1.bf16.xpose.msra.mxu0 0
        %737 = vmatprep.subr.bf16.mxu0 0
        %738 = vmatpush1.bf16.xpose.msra.mxu0 0
        %739 = vmatprep.subr.bf16.mxu0 0
        %740 = vmatpush1.bf16.xpose.msra.mxu0 0
        %741 = vmatprep.subr.bf16.mxu0 0
        %742 = vmatpush1.bf16.xpose.msra.mxu0 0
        %743 = vmatprep.subr.bf16.mxu0 0
        %744 = vmatpush1.bf16.xpose.msra.mxu0 0
        %745 = vmatprep.subr.bf16.mxu0 0
        %746 = vmatpush1.bf16.xpose.msra.mxu0 0
        %747 = vmatprep.subr.bf16.mxu0 0
        %748 = vmatpush1.bf16.xpose.msra.mxu0 0
        %749 = vmatprep.subr.bf16.mxu0 0
        %750 = vmatpush1.bf16.xpose.msra.mxu0 0
        %751 = vmatprep.subr.bf16.mxu0 0
        %752 = vmatpush1.bf16.xpose.msra.mxu0 0
        %753 = vmatprep.subr.bf16.mxu0 0
        %754 = vmatpush1.bf16.xpose.msra.mxu0 0
        %755 = vmatprep.subr.bf16.mxu0 0
        %756 = vmatpush1.bf16.xpose.msra.mxu0 0
        %757 = vmatprep.subr.bf16.mxu0 0
        %758 = vmatpush1.bf16.xpose.msra.mxu0 0
        %759 = vmatprep.subr.bf16.mxu0 0
        %760 = vmatpush1.bf16.xpose.msra.mxu0 0
        %761 = vmatprep.subr.bf16.mxu0 0
        %762 = vmatpush1.bf16.xpose.msra.mxu0 0
        %763 = vmatprep.mubr.bf16.mxu0 0
        %764 = vmatmul.mubr.bf16.gmra.mrb[0].mxu0 %v726
        %v765 = vpop.f32.mrb[0].mxu0
        %v766 = vadd.f32 0.0, %v765
        %v767 = vpop.f32.mrb[0].mxu0
        %v768 = vpop.f32.mrb[0].mxu0
        %v769 = vpop.f32.mrb[0].mxu0
        %770 = vdwg.mxu0
        %v771 = vsel %vm525, %v766, -inf
        %772 = vmax.xlane.f32.xlu0 %v771
        %v773 = vpop.xlane.xlu0 %772
        %v774 = vsub.f32 %v766, %v773
        %v775 = vmul.f32 %v774, 1.442695
        %v776 = vpow.pop %v775
        %v777 = vsel %vm525, %v776, 0.0
        %778 = vadd.xlane.f32.xlu0 %v777
        %v779 = vpop.xlane.xlu0 %778
        %v780 = vpack.c.bf16 %v776, %v776
        %781 = vrot.lane.b32.xlu0 %v722, 48
        %v782 = vpop.permute.xlu0 %781
        %v784 = vsel %vm525, %v780, 0
        %v787 = vsel %vm544, %v782, 0
        %789 = vmatprep.subr.bf16.mxu0 0
        %790 = vmatpush1.bf16.msra.mxu0 %v787
        %791 = vmatprep.subr.bf16.mxu0 0
        %792 = vmatpush1.bf16.msra.mxu0 0
        %793 = vmatprep.subr.bf16.mxu0 0
        %794 = vmatpush1.bf16.msra.mxu0 0
        %795 = vmatprep.subr.bf16.mxu0 0
        %796 = vmatpush1.bf16.msra.mxu0 0
        %797 = vmatprep.subr.bf16.mxu0 0
        %798 = vmatpush1.bf16.msra.mxu0 0
        %799 = vmatprep.subr.bf16.mxu0 0
        %800 = vmatpush1.bf16.msra.mxu0 0
        %801 = vmatprep.subr.bf16.mxu0 0
        %802 = vmatpush1.bf16.msra.mxu0 0
        %803 = vmatprep.subr.bf16.mxu0 0
        %804 = vmatpush1.bf16.msra.mxu0 0
        %805 = vmatprep.subr.bf16.mxu0 0
        %806 = vmatpush1.bf16.msra.mxu0 0
        %807 = vmatprep.subr.bf16.mxu0 0
        %808 = vmatpush1.bf16.msra.mxu0 0
        %809 = vmatprep.subr.bf16.mxu0 0
        %810 = vmatpush1.bf16.msra.mxu0 0
        %811 = vmatprep.subr.bf16.mxu0 0
        %812 = vmatpush1.bf16.msra.mxu0 0
        %813 = vmatprep.subr.bf16.mxu0 0
        %814 = vmatpush1.bf16.msra.mxu0 0
        %815 = vmatprep.subr.bf16.mxu0 0
        %816 = vmatpush1.bf16.msra.mxu0 0
        %817 = vmatprep.subr.bf16.mxu0 0
        %818 = vmatpush1.bf16.msra.mxu0 0
        %819 = vmatprep.subr.bf16.mxu0 0
        %820 = vmatpush1.bf16.msra.mxu0 0
        %821 = vmatprep.mubr.bf16.mxu0 0
        %822 = vmatmul.mubr.bf16.gmra.mrb[0].mxu0 %v784
        %v823 = vpop.f32.mrb[0].mxu0
        %v824 = vadd.f32 0.0, %v823
        %v825 = vpop.f32.mrb[0].mxu0
        %v826 = vpop.f32.mrb[0].mxu0
        %v827 = vpop.f32.mrb[0].mxu0
        %828 = vdwg.mxu0
        %v829 = vrcp.pop %v779
        %v830 = vmul.f32 %v824, %v829
        %v831 = vpack.c.bf16 %v830, %v830
        %v833 = vunpack.c.l.b16 %v831
        %v834 = vpack.c.b16 %v833, %v833
        %835 = vrot.lane.b32.xlu0 %v834, 32
        %v836 = vpop.permute.xlu0 %835
        %vm838 = vcmask 388352
        %839 = vst.msk [vmem:[#allocation3] sm:$0xf] %vm838, %v836
        %v840 = vld [vmem:[#allocation2] sm:$0xf]
        %841 = vrot.lane.b32.xlu0 %v476, 80
        %v842 = vpop.permute.xlu0 %841
        %v844 = vunpack.c.l.b16 %v840
        %v845 = vpack.c.b16 %v844, %v844
        %846 = vrot.lane.b32.xlu0 %v845, 32
        %v847 = vpop.permute.xlu0 %846
        %v849 = vsel %vm478, %v842, 0
        %v852 = vsel %vm478, %v847, 0
        %854 = vmatprep.subr.bf16.mxu0 0
        %855 = vmatpush1.bf16.xpose.msra.mxu0 %v852
        %856 = vmatprep.subr.bf16.mxu0 0
        %857 = vmatpush1.bf16.xpose.msra.mxu0 0
        %858 = vmatprep.subr.bf16.mxu0 0
        %859 = vmatpush1.bf16.xpose.msra.mxu0 0
        %860 = vmatprep.subr.bf16.mxu0 0
        %861 = vmatpush1.bf16.xpose.msra.mxu0 0
        %862 = vmatprep.subr.bf16.mxu0 0
        %863 = vmatpush1.bf16.xpose.msra.mxu0 0
        %864 = vmatprep.subr.bf16.mxu0 0
        %865 = vmatpush1.bf16.xpose.msra.mxu0 0
        %866 = vmatprep.subr.bf16.mxu0 0
        %867 = vmatpush1.bf16.xpose.msra.mxu0 0
        %868 = vmatprep.subr.bf16.mxu0 0
        %869 = vmatpush1.bf16.xpose.msra.mxu0 0
        %870 = vmatprep.subr.bf16.mxu0 0
        %871 = vmatpush1.bf16.xpose.msra.mxu0 0
        %872 = vmatprep.subr.bf16.mxu0 0
        %873 = vmatpush1.bf16.xpose.msra.mxu0 0
        %874 = vmatprep.subr.bf16.mxu0 0
        %875 = vmatpush1.bf16.xpose.msra.mxu0 0
        %876 = vmatprep.subr.bf16.mxu0 0
        %877 = vmatpush1.bf16.xpose.msra.mxu0 0
        %878 = vmatprep.subr.bf16.mxu0 0
        %879 = vmatpush1.bf16.xpose.msra.mxu0 0
        %880 = vmatprep.subr.bf16.mxu0 0
        %881 = vmatpush1.bf16.xpose.msra.mxu0 0
        %882 = vmatprep.subr.bf16.mxu0 0
        %883 = vmatpush1.bf16.xpose.msra.mxu0 0
        %884 = vmatprep.subr.bf16.mxu0 0
        %885 = vmatpush1.bf16.xpose.msra.mxu0 0
        %886 = vmatprep.mubr.bf16.mxu0 0
        %887 = vmatmul.mubr.bf16.gmra.mrb[0].mxu0 %v849
        %v888 = vpop.f32.mrb[0].mxu0
        %v889 = vadd.f32 0.0, %v888
        %v890 = vpop.f32.mrb[0].mxu0
        %v891 = vpop.f32.mrb[0].mxu0
        %v892 = vpop.f32.mrb[0].mxu0
        %893 = vdwg.mxu0
        %v894 = vsel %vm525, %v889, -inf
        %895 = vmax.xlane.f32.xlu0 %v894
        %v896 = vpop.xlane.xlu0 %895
        %v897 = vsub.f32 %v889, %v896
        %v898 = vmul.f32 %v897, 1.442695
        %v899 = vpow.pop %v898
        %v900 = vsel %vm525, %v899, 0.0
        %901 = vadd.xlane.f32.xlu0 %v900
        %v902 = vpop.xlane.xlu0 %901
        %v903 = vpack.c.bf16 %v899, %v899
        %904 = vrot.lane.b32.xlu0 %v845, 16
        %v905 = vpop.permute.xlu0 %904
        %v907 = vsel %vm525, %v903, 0
        %v910 = vsel %vm544, %v905, 0
        %912 = vmatprep.subr.bf16.mxu0 0
        %913 = vmatpush1.bf16.msra.mxu0 %v910
        %914 = vmatprep.subr.bf16.mxu0 0
        %915 = vmatpush1.bf16.msra.mxu0 0
        %916 = vmatprep.subr.bf16.mxu0 0
        %917 = vmatpush1.bf16.msra.mxu0 0
        %918 = vmatprep.subr.bf16.mxu0 0
        %919 = vmatpush1.bf16.msra.mxu0 0
        %920 = vmatprep.subr.bf16.mxu0 0
        %921 = vmatpush1.bf16.msra.mxu0 0
        %922 = vmatprep.subr.bf16.mxu0 0
        %923 = vmatpush1.bf16.msra.mxu0 0
        %924 = vmatprep.subr.bf16.mxu0 0
        %925 = vmatpush1.bf16.msra.mxu0 0
        %926 = vmatprep.subr.bf16.mxu0 0
        %927 = vmatpush1.bf16.msra.mxu0 0
        %928 = vmatprep.subr.bf16.mxu0 0
        %929 = vmatpush1.bf16.msra.mxu0 0
        %930 = vmatprep.subr.bf16.mxu0 0
        %931 = vmatpush1.bf16.msra.mxu0 0
        %932 = vmatprep.subr.bf16.mxu0 0
        %933 = vmatpush1.bf16.msra.mxu0 0
        %934 = vmatprep.subr.bf16.mxu0 0
        %935 = vmatpush1.bf16.msra.mxu0 0
        %936 = vmatprep.subr.bf16.mxu0 0
        %937 = vmatpush1.bf16.msra.mxu0 0
        %938 = vmatprep.subr.bf16.mxu0 0
        %939 = vmatpush1.bf16.msra.mxu0 0
        %940 = vmatprep.subr.bf16.mxu0 0
        %941 = vmatpush1.bf16.msra.mxu0 0
        %942 = vmatprep.subr.bf16.mxu0 0
        %943 = vmatpush1.bf16.msra.mxu0 0
        %944 = vmatprep.mubr.bf16.mxu0 0
        %945 = vmatmul.mubr.bf16.gmra.mrb[0].mxu0 %v907
        %v946 = vpop.f32.mrb[0].mxu0
        %v947 = vadd.f32 0.0, %v946
        %v948 = vpop.f32.mrb[0].mxu0
        %v949 = vpop.f32.mrb[0].mxu0
        %v950 = vpop.f32.mrb[0].mxu0
        %951 = vdwg.mxu0
        %v952 = vrcp.pop %v902
        %v953 = vmul.f32 %v947, %v952
        %v954 = vpack.c.bf16 %v953, %v953
        %v956 = vunpack.c.l.b16 %v954
        %v957 = vpack.c.b16 %v956, %v956
        %958 = vrot.lane.b32.xlu0 %v957, 48
        %v959 = vpop.permute.xlu0 %958
        %vm961 = vcmask 519552
        %962 = vst.msk [vmem:[#allocation3] sm:$0xf] %vm961, %v959
        %v963 = vld [vmem:[#allocation3] sm:$0xf]
        %v964 = vld [vmem:[%s3] sm:$0xf]
        %v965 = vld [vmem:[%s3 + $0x4] sm:$0xf]
        %v966 = vld [vmem:[%s3 + $0x8] sm:$0xf]
        %v967 = vld [vmem:[%s3 + $0xc] sm:$0xf]
        %v968 = vld [vmem:[%s3 + $0x10] sm:$0xf]
        %v969 = vld [vmem:[%s3 + $0x14] sm:$0xf]
        %v970 = vld [vmem:[%s3 + $0x18] sm:$0xf]
        %v971 = vld [vmem:[%s3 + $0x1c] sm:$0xf]
        %v972 = vld [vmem:[%s4] sm:$0x1]
        %v974 = vlaneseq
        %v975 = vshrl.u32 %v974, 7
        %v976 = vsub.s32 0, %v975
        %v977 = vrot.slane %v972, %v976
        %v987 = vunpack.c.l.b16 %v964
        %v988 = vunpack.c.l.b16 %v965
        %v989 = vunpack.c.l.b16 %v966
        %v990 = vunpack.c.l.b16 %v967
        %v991 = vunpack.c.l.b16 %v968
        %v992 = vunpack.c.l.b16 %v969
        %v993 = vunpack.c.l.b16 %v970
        %v994 = vunpack.c.l.b16 %v971
        %v995 = vpack.c.b16 %v988, %v987
        %v996 = vpack.c.b16 %v990, %v989
        %v997 = vpack.c.b16 %v992, %v991
        %v998 = vpack.c.b16 %v994, %v993
        %vm1003 = vcmask 523264
        %v1005 = vsel %vm1003, %v963, 0
        %1007 = vmatprep.subr.bf16.mxu0 0
        %1008 = vmatpush1.bf16.msra.mxu0 %v995
        %1009 = vmatprep.subr.bf16.mxu0 0
        %1010 = vmatpush1.bf16.msra.mxu0 %v996
        %1011 = vmatprep.subr.bf16.mxu0 0
        %1012 = vmatpush1.bf16.msra.mxu0 %v997
        %1013 = vmatprep.subr.bf16.mxu0 0
        %1014 = vmatpush1.bf16.msra.mxu0 %v998
        %1015 = vmatprep.subr.bf16.mxu0 0
        %1016 = vmatpush1.bf16.msra.mxu0 0
        %1017 = vmatprep.subr.bf16.mxu0 0
        %1018 = vmatpush1.bf16.msra.mxu0 0
        %1019 = vmatprep.subr.bf16.mxu0 0
        %1020 = vmatpush1.bf16.msra.mxu0 0
        %1021 = vmatprep.subr.bf16.mxu0 0
        %1022 = vmatpush1.bf16.msra.mxu0 0
        %1023 = vmatprep.subr.bf16.mxu0 0
        %1024 = vmatpush1.bf16.msra.mxu0 0
        %1025 = vmatprep.subr.bf16.mxu0 0
        %1026 = vmatpush1.bf16.msra.mxu0 0
        %1027 = vmatprep.subr.bf16.mxu0 0
        %1028 = vmatpush1.bf16.msra.mxu0 0
        %1029 = vmatprep.subr.bf16.mxu0 0
        %1030 = vmatpush1.bf16.msra.mxu0 0
        %1031 = vmatprep.subr.bf16.mxu0 0
        %1032 = vmatpush1.bf16.msra.mxu0 0
        %1033 = vmatprep.subr.bf16.mxu0 0
        %1034 = vmatpush1.bf16.msra.mxu0 0
        %1035 = vmatprep.subr.bf16.mxu0 0
        %1036 = vmatpush1.bf16.msra.mxu0 0
        %1037 = vmatprep.subr.bf16.mxu0 0
        %1038 = vmatpush1.bf16.msra.mxu0 0
        %1039 = vmatprep.mubr.bf16.mxu0 0
        %1040 = vmatmul.mubr.bf16.gmra.mrb[0].mxu0 %v1005
        %v1041 = vpop.f32.mrb[0].mxu0
        %v1042 = vadd.f32 %v977, %v1041
        %v1043 = vpop.f32.mrb[0].mxu0
        %v1044 = vpop.f32.mrb[0].mxu0
        %v1045 = vpop.f32.mrb[0].mxu0
        %1046 = vdwg.mxu0
        %1047 = vst [vmem:[%s253] sm:$0xff] %v1042
        %s1048 = sand.u32 %s154, 1
        %s1049 = scalar_lea.sflag [#allocation6], %s1048
        %s1050 = sand.u32 %s154, 1
        %s1051 = smul.addr %s1050, 8
        %s1052 = scalar_lea.vmem [#allocation7], %s1051
        // Predicated region
        $region49: #{tpu_custom_call.1} parent=39 // pred_check
          %p1053 = pneg %p164
        $region50: #{tpu_custom_call.1} parent=39 // pred_check_branch
          %1055 = sbr.rel (%p1053) target = $region52
        $region51: #{tpu_custom_call.1} parent=39 // pred_region
          %s1057 = ssub.s32 128, 128
          %1058 = vsyncadd %s1049, %s1057
          %s1059 = sadd.s32 %s27, %s26
          %s1060 = smul.addr %s1059, 128
          %s1061 = scalar_lea.hbm %s5, %s1060
          %s1063 = sshll.u32 %s1052, 4
          %s1064 = int_to_ptr.vmem [resolvable:$true] %s1063
          %1066 = dma.vmem_to_hbm [thread:$0]  %s1064, 128, %s1061, %s1049
        $region52: #{tpu_custom_call.1} parent=39 // pred_fallthru
          _
      $region40: #{tpu_custom_call.1} parent=5 // pred_fallthru
        _
      %p1067 = scmp.le.s32.totalorder 2, %s17
      // Predicated region
      $region53: #{tpu_custom_call.1} parent=5 // pred_check
        %p1068 = pneg %p1067
      $region54: #{tpu_custom_call.1} parent=5 // pred_check_branch
        %1070 = sbr.rel (%p1068) target = $region56
      $region55: #{tpu_custom_call.1} parent=5 // pred_region
        %s1071 = ssub.s32 %s17, 2
        // Predicated region
        $region57: #{tpu_custom_call.1} parent=55 // pred_check
          %p1072 = pneg %p170
        $region58: #{tpu_custom_call.1} parent=55 // pred_check_branch
          %1074 = sbr.rel (%p1072) target = $region60
        $region59: #{tpu_custom_call.1} parent=55 // pred_region
          %s1075 = sand.u32 %s155, 1
          %s1076 = scalar_lea.sflag [#allocation6], %s1075
          %s1077 = sand.u32 %s155, 1
          %s1078 = smul.addr %s1077, 8
          %s1079 = scalar_lea.vmem [#allocation7], %s1078
          %1080 = dma.done %s1076, 128
        $region60: #{tpu_custom_call.1} parent=55 // pred_fallthru
          _
      $region56: #{tpu_custom_call.1} parent=5 // pred_fallthru
        _
    $region6: #{tpu_custom_call.1} parent=1 // loop_footer
      %s21 = sadd.s32 1, %s17
    $region7: #{tpu_custom_call.1} parent=1 // loop_footer_branch
      %16 = sbr.rel target = $region3
    $region8: #{tpu_custom_call.1} parent=1 // loop_exit
      _
    %1081 = vsyncpa [#allocation5], 1
    %s1082 = scalar_lea.sflag [#allocation5], 1
    %1083 = vsyncpa %s1082, 1
    %1084 = vsyncpa [#allocation6], 1
    %s1085 = scalar_lea.sflag [#allocation6], 1
    %1086 = vsyncpa %s1085, 1

</llo_original>
